<compile_context>
chip_gen: v7x
topology: tpu7x:2x2x1
jax: 0.10.0
libtpu: 0.0.40
codegen_flags: <defaults>
</compile_context>

<pallas_src>
import functools

import jax
import jax.numpy as jnp
from jax.experimental import pallas as pl
from jax.experimental.pallas import tpu as pltpu


# ----------------------------------------------------------------------------
# In-kernel math helpers
# ----------------------------------------------------------------------------
def _erf(x):
    # Abramowitz & Stegun 7.1.26 rational approximation (max abs err ~1.5e-7).
    # VPU/EUP filler; not the bottleneck at these sizes.
    a1, a2, a3, a4, a5 = (0.254829592, -0.284496736, 1.421413741,
                          -1.453152027, 1.061405429)
    p = 0.3275911
    sgn = jnp.where(x >= 0.0, 1.0, -1.0)
    ax = jnp.abs(x)
    t = 1.0 / (1.0 + p * ax)
    poly = ((((a5 * t + a4) * t + a3) * t + a2) * t + a1) * t
    return sgn * (1.0 - poly * jnp.exp(-ax * ax))


def _gelu_exact(x):
    # Matches torch.nn.functional.gelu (default, erf-based).
    return 0.5 * x * (1.0 + _erf(x * 0.7071067811865475))


# ----------------------------------------------------------------------------
# Fused MLM-heads kernel: grid axis 0 = head index.
# Each step: dense -> exact GELU -> LayerNorm(eps) -> decoder (+bias),
# writing a lane-dense [Bp, OPAD] slab for that head.
# ----------------------------------------------------------------------------
def fused_mlm_kernel(x_ref, w1_ref, b1_ref, g_ref, be_ref, w2_ref, b2_ref,
                     o_ref, *, eps):
    x = x_ref[...]                                               # [Bp, E]
    h = jnp.dot(x, w1_ref[0], preferred_element_type=jnp.float32)
    h = h + b1_ref[0]                                            # [Bp, H]
    h = _gelu_exact(h)
    mu = jnp.mean(h, axis=-1, keepdims=True)
    var = jnp.mean((h - mu) * (h - mu), axis=-1, keepdims=True)  # biased var
    h = (h - mu) * jax.lax.rsqrt(var + eps)
    h = h * g_ref[0] + be_ref[0]
    out = jnp.dot(h, w2_ref[0], preferred_element_type=jnp.float32)
    o_ref[0] = out + b2_ref[0]                                   # [Bp, OPAD]


def fused_mlm_heads(x, stacked, *, eps=1e-12):
    """Run all heads in one pallas_call. Returns [NH, B, OPAD] (valid cols to
    be sliced by the caller)."""
    NH, E, H = stacked["w1"].shape
    OPAD = stacked["w2"].shape[2]
    B = x.shape[0]
    Bp = ((B + 7) // 8) * 8                    # sublane-align the batch tile
    if Bp != B:
        x = jnp.pad(x, ((0, Bp - B), (0, 0)))  # zero rows: finite through LN

    out = pl.pallas_call(
        functools.partial(fused_mlm_kernel, eps=eps),
        out_shape=jax.ShapeDtypeStruct((NH, Bp, OPAD), jnp.float32),
        grid=(NH,),
        in_specs=[
            pl.BlockSpec((Bp, E), lambda h: (0, 0)),      # embeds (resident)
            pl.BlockSpec((1, E, H), lambda h: (h, 0, 0)),
            pl.BlockSpec((1, 1, H), lambda h: (h, 0, 0)),
            pl.BlockSpec((1, 1, H), lambda h: (h, 0, 0)),
            pl.BlockSpec((1, 1, H), lambda h: (h, 0, 0)),
            pl.BlockSpec((1, H, OPAD), lambda h: (h, 0, 0)),
            pl.BlockSpec((1, 1, OPAD), lambda h: (h, 0, 0)),
        ],
        out_specs=pl.BlockSpec((1, Bp, OPAD), lambda h: (h, 0, 0)),
        compiler_params=pltpu.CompilerParams(
            # Size-2 head axis: shards across the two TensorCores on v7x,
            # harmless (serial) on v5e/v6e.
            dimension_semantics=("parallel",)),
    )(x, stacked["w1"], stacked["b1"], stacked["gamma"], stacked["beta"],
      stacked["w2"], stacked["b2"])
    return out[:, :B, :]


# ----------------------------------------------------------------------------
# MTHead configuration (synthetic, deterministic)
# ----------------------------------------------------------------------------
MAX_FOLLOWUP = 6
TA_EMBED_DIM = 32
HEAD_DIM_DICT = {"head_risk": 32, "head_clin": 32}          # hidden sizes
TASK_DIM_DICT = {"cancer_risk": MAX_FOLLOWUP + 1,           # hazard + base
                 "cancer_presence": 1,
                 "clinical_number": 30,                      # 3 digits x 10
                 "subtlety": 5}
NUM_HEAD_DICT = {"cancer_risk": 2, "cancer_presence": 2,
                 "clinical_number": 1, "subtlety": 1}
TASK_HEAD_MAP = {"cancer_risk": "head_risk", "cancer_presence": "head_risk",
                 "clinical_number": "head_clin", "subtlety": "head_clin"}
HEAD_ORDER = ["head_risk", "head_clin"]
OPAD = 128                                                   # lane-dense width


def get_head_task_map():
    m = {}
    for kt, kh in TASK_HEAD_MAP.items():
        m.setdefault(kh, []).append(kt)
    return m


def get_head_task_param(head_task_map):
    head_task_dim, head_out_dim = {}, {}
    for kh, ktl in head_task_map.items():
        cur = 0
        for k in ktl:
            d = TASK_DIM_DICT[k] * NUM_HEAD_DICT[k]
            head_task_dim[k] = [cur, cur + d]
            cur += d
        head_out_dim[kh] = cur
    return head_task_dim, head_out_dim


HEAD_TASK_MAP = get_head_task_map()
HEAD_TASK_DIM, HEAD_OUT_DIM = get_head_task_param(HEAD_TASK_MAP)


def init_params(key):
    """Per-head params (for the pure-JAX ref) + stacked/padded params for the
    fused kernel."""
    per_head = {}
    for kh in HEAD_ORDER:
        H = HEAD_DIM_DICT[kh]
        O = HEAD_OUT_DIM[kh]
        key, k1, k2, k3 = jax.random.split(key, 4)
        per_head[kh] = {
            "w1": 0.05 * jax.random.normal(k1, (TA_EMBED_DIM, H), jnp.float32),
            "b1": 0.01 * jax.random.normal(k2, (1, H), jnp.float32),
            "gamma": jnp.ones((1, H), jnp.float32),
            "beta": jnp.zeros((1, H), jnp.float32),
            "w2": 0.05 * jax.random.normal(k3, (H, O), jnp.float32),
            "b2": jnp.zeros((1, O), jnp.float32),   # MLMHead bias init = zeros
        }

    # All heads share H in this config; required for the stacked kernel.
    hs = {HEAD_DIM_DICT[kh] for kh in HEAD_ORDER}
    assert len(hs) == 1, "fused kernel assumes equal hidden size per head"

    def pad_o(a):
        return jnp.pad(a, ((0, 0), (0, OPAD - a.shape[1])))

    stacked = {
        "w1": jnp.stack([per_head[kh]["w1"] for kh in HEAD_ORDER]),
        "b1": jnp.stack([per_head[kh]["b1"] for kh in HEAD_ORDER]),
        "gamma": jnp.stack([per_head[kh]["gamma"] for kh in HEAD_ORDER]),
        "beta": jnp.stack([per_head[kh]["beta"] for kh in HEAD_ORDER]),
        "w2": jnp.stack([pad_o(per_head[kh]["w2"]) for kh in HEAD_ORDER]),
        "b2": jnp.stack([pad_o(per_head[kh]["b2"]) for kh in HEAD_ORDER]),
    }

    # Hazard_Layer mask: torch.t(torch.tril(ones)) -> upper triangular.
    # Only used by the pure-JAX reference; the kernel path uses cumsum.
    tri = jnp.tril(jnp.ones((MAX_FOLLOWUP, MAX_FOLLOWUP), jnp.float32)).T
    return {"per_head": per_head, "stacked": stacked, "hazard_mask": tri}


# ----------------------------------------------------------------------------
# Forward (MTHead.forward in eval mode: pred_logits + inference)
# ----------------------------------------------------------------------------
def mt_head_forward(embeds, params):
    B = embeds.shape[0]
    out_all = fused_mlm_heads(embeds, params["stacked"])      # [NH, B, OPAD]

    logits = {}
    for hi, kh in enumerate(HEAD_ORDER):
        for kt in HEAD_TASK_MAP[kh]:
            nh = NUM_HEAD_DICT[kt]
            s, e = HEAD_TASK_DIM[kt]
            out_kt = out_all[hi, :, s:e].reshape(B, nh, -1)
            if kt == "cancer_risk":
                # Hazard_Layer: upper-triangular mask matmul == causal cumsum.
                T = MAX_FOLLOWUP
                x1 = out_kt[..., :T]
                base = out_kt[..., T:T + 1]
                cum = jnp.cumsum(x1, axis=-1) + base
                out_kt = jax.nn.sigmoid(cum)      # inference sigmoid fused
            logits[kt] = out_kt

    # inference() post-processing (tiny ops -> plain JAX glue)
    out = {}
    for kt, l in logits.items():
        if kt == "cancer_risk":
            out[kt] = l                                       # already sigmoid
        elif kt == "clinical_number":
            l4 = l.reshape(l.shape[0], l.shape[1], 10, -1)
            probs = jax.nn.softmax(l4, axis=2)
            d = jnp.argmax(probs, axis=2)                     # [B, nh, 3]
            out[kt] = d[:, :, 0:1] * 100 + d[:, :, 1:2] * 10 + d[:, :, 2:3]
        else:
            out[kt] = jax.nn.softmax(l, axis=2)
    return out


# TODO(synk): training loss() path (BCE / cross-entropy with dynamic loss
# weighting) is not part of the eval forward and is not implemented here.


# ----------------------------------------------------------------------------
# Pure-JAX reference (unfused, unpadded, mask-matmul hazard) for sanity check
# ----------------------------------------------------------------------------
def mlm_head_ref(x, p, eps=1e-12):
    h = x @ p["w1"] + p["b1"]
    h = jax.nn.gelu(h, approximate=False)
    mu = h.mean(-1, keepdims=True)
    var = ((h - mu) ** 2).mean(-1, keepdims=True)
    h = (h - mu) / jnp.sqrt(var + eps) * p["gamma"] + p["beta"]
    return h @ p["w2"] + p["b2"]


def mt_head_ref(embeds, params):
    B = embeds.shape[0]
    logits = {}
    for kh in HEAD_ORDER:
        out_kh = mlm_head_ref(embeds, params["per_head"][kh])
        for kt in HEAD_TASK_MAP[kh]:
            nh = NUM_HEAD_DICT[kt]
            s, e = HEAD_TASK_DIM[kt]
            out_kt = out_kh[:, s:e].reshape(B, nh, -1)
            if kt == "cancer_risk":
                flat = out_kt.reshape(B * nh, -1)
                T = MAX_FOLLOWUP
                cum = flat[:, :T] @ params["hazard_mask"] + flat[:, T:T + 1]
                out_kt = jax.nn.sigmoid(cum).reshape(B, nh, -1)
            logits[kt] = out_kt
    out = {}
    for kt, l in logits.items():
        if kt == "cancer_risk":
            out[kt] = l
        elif kt == "clinical_number":
            l4 = l.reshape(l.shape[0], l.shape[1], 10, -1)
            d = jnp.argmax(jax.nn.softmax(l4, axis=2), axis=2)
            out[kt] = d[:, :, 0:1] * 100 + d[:, :, 1:2] * 10 + d[:, :, 2:3]
        else:
            out[kt] = jax.nn.softmax(l, axis=2)
    return out


if __name__ == "__main__":
    key = jax.random.PRNGKey(0)
    kp, kx = jax.random.split(key)
    params = init_params(kp)

    B = 16
    embeds = jax.random.normal(kx, (B, TA_EMBED_DIM), jnp.float32)

    out = jax.block_until_ready(jax.jit(mt_head_forward)(embeds, params))
    ref = jax.block_until_ready(mt_head_ref(embeds, params))

    for k in ref:
        a = jnp.asarray(out[k], jnp.float32)
        b = jnp.asarray(ref[k], jnp.float32)
        assert a.shape == b.shape, (k, a.shape, b.shape)
        assert jnp.allclose(a, b, rtol=1e-4, atol=1e-5), (
            k, float(jnp.max(jnp.abs(a - b))))

    print("KERNEL_OK")
</pallas_src>

<mosaic_0001>
module attributes {stable_mosaic.version = 11 : i64} {
  func.func @fused_mlm_kernel(%arg0: i32, %arg1: memref<16x32xf32, #tpu.memory_space<vmem>>, %arg2: memref<1x32x32xf32, #tpu.memory_space<vmem>>, %arg3: memref<1x1x32xf32, #tpu.memory_space<vmem>>, %arg4: memref<1x1x32xf32, #tpu.memory_space<vmem>>, %arg5: memref<1x1x32xf32, #tpu.memory_space<vmem>>, %arg6: memref<1x32x128xf32, #tpu.memory_space<vmem>>, %arg7: memref<1x1x128xf32, #tpu.memory_space<vmem>>, %arg8: memref<1x16x128xf32, #tpu.memory_space<vmem>>) attributes {dimension_semantics = [#tpu.dimension_semantics<parallel>], iteration_bounds = array<i64: 2>, scalar_prefetch = 0 : i64, scratch_operands = 0 : i64, tpu.core_type = #tpu.core_type<tc>, window_params = [{pipeline_mode = #tpu.pipeline_mode<synchronous>, transform_indices = @transform_0, window_bounds = array<i64: 16, 32>}, {transform_indices = @transform_1, window_bounds = array<i64: 1, 32, 32>}, {transform_indices = @transform_2, window_bounds = array<i64: 1, 1, 32>}, {transform_indices = @transform_3, window_bounds = array<i64: 1, 1, 32>}, {transform_indices = @transform_4, window_bounds = array<i64: 1, 1, 32>}, {transform_indices = @transform_5, window_bounds = array<i64: 1, 32, 128>}, {transform_indices = @transform_6, window_bounds = array<i64: 1, 1, 128>}, {transform_indices = @transform_7, window_bounds = array<i64: 1, 16, 128>}]} {
    %c0 = arith.constant 0 : index
    %c0_0 = arith.constant 0 : index
    %0 = vector.load %arg1[%c0, %c0_0] : memref<16x32xf32, #tpu.memory_space<vmem>>, vector<16x32xf32>
    %c0_1 = arith.constant 0 : index
    %c0_2 = arith.constant 0 : index
    %c0_3 = arith.constant 0 : index
    %1 = vector.load %arg2[%c0_1, %c0_2, %c0_3] : memref<1x32x32xf32, #tpu.memory_space<vmem>>, vector<1x32x32xf32>
    %2 = vector.shape_cast %1 : vector<1x32x32xf32> to vector<32x32xf32>
    %cst = arith.constant dense<0.000000e+00> : vector<16x32xf32>
    %3 = tpu.matmul %0, %2, %cst {dimension_numbers = #tpu.dot_dimension_numbers<[1], [0], [0], [1], [0, 0, 1, 1], [], []>} : vector<16x32xf32>, vector<32x32xf32>, vector<16x32xf32> -> vector<16x32xf32>
    %c0_4 = arith.constant 0 : index
    %c0_5 = arith.constant 0 : index
    %c0_6 = arith.constant 0 : index
    %4 = vector.load %arg3[%c0_4, %c0_5, %c0_6] : memref<1x1x32xf32, #tpu.memory_space<vmem>>, vector<1x1x32xf32>
    %5 = vector.shape_cast %4 : vector<1x1x32xf32> to vector<1x32xf32>
    %6 = vector.broadcast %5 : vector<1x32xf32> to vector<16x32xf32>
    %7 = arith.addf %3, %6 : vector<16x32xf32>
    %cst_7 = arith.constant 5.000000e-01 : f32
    %8 = vector.broadcast %cst_7 : f32 to vector<16x32xf32>
    %9 = arith.mulf %8, %7 : vector<16x32xf32>
    %cst_8 = arith.constant 0.707106769 : f32
    %10 = vector.broadcast %cst_8 : f32 to vector<16x32xf32>
    %11 = arith.mulf %7, %10 : vector<16x32xf32>
    %cst_9 = arith.constant 0.000000e+00 : f32
    %12 = vector.broadcast %cst_9 : f32 to vector<16x32xf32>
    %13 = arith.cmpf oge, %11, %12 : vector<16x32xf32>
    %cst_10 = arith.constant 1.000000e+00 : f32
    %cst_11 = arith.constant -1.000000e+00 : f32
    %14 = vector.broadcast %cst_10 : f32 to vector<16x32xf32>
    %15 = vector.broadcast %cst_11 : f32 to vector<16x32xf32>
    %16 = arith.select %13, %14, %15 : vector<16x32xi1>, vector<16x32xf32>
    %17 = math.absf %11 : vector<16x32xf32>
    %cst_12 = arith.constant 0.327591091 : f32
    %18 = vector.broadcast %cst_12 : f32 to vector<16x32xf32>
    %19 = arith.mulf %18, %17 : vector<16x32xf32>
    %cst_13 = arith.constant 1.000000e+00 : f32
    %20 = vector.broadcast %cst_13 : f32 to vector<16x32xf32>
    %21 = arith.addf %20, %19 : vector<16x32xf32>
    %cst_14 = arith.constant 1.000000e+00 : f32
    %22 = vector.broadcast %cst_14 : f32 to vector<16x32xf32>
    %23 = arith.divf %22, %21 : vector<16x32xf32>
    %cst_15 = arith.constant 1.06140542 : f32
    %24 = vector.broadcast %cst_15 : f32 to vector<16x32xf32>
    %25 = arith.mulf %24, %23 : vector<16x32xf32>
    %cst_16 = arith.constant -1.45315206 : f32
    %26 = vector.broadcast %cst_16 : f32 to vector<16x32xf32>
    %27 = arith.addf %25, %26 : vector<16x32xf32>
    %28 = arith.mulf %27, %23 : vector<16x32xf32>
    %cst_17 = arith.constant 1.42141378 : f32
    %29 = vector.broadcast %cst_17 : f32 to vector<16x32xf32>
    %30 = arith.addf %28, %29 : vector<16x32xf32>
    %31 = arith.mulf %30, %23 : vector<16x32xf32>
    %cst_18 = arith.constant -0.284496725 : f32
    %32 = vector.broadcast %cst_18 : f32 to vector<16x32xf32>
    %33 = arith.addf %31, %32 : vector<16x32xf32>
    %34 = arith.mulf %33, %23 : vector<16x32xf32>
    %cst_19 = arith.constant 0.254829586 : f32
    %35 = vector.broadcast %cst_19 : f32 to vector<16x32xf32>
    %36 = arith.addf %34, %35 : vector<16x32xf32>
    %37 = arith.mulf %36, %23 : vector<16x32xf32>
    %cst_20 = arith.constant 0.000000e+00 : f32
    %38 = vector.broadcast %cst_20 : f32 to vector<16x32xf32>
    %39 = arith.subf %38, %17 : vector<16x32xf32>
    %40 = arith.mulf %39, %17 : vector<16x32xf32>
    %41 = math.exp %40 : vector<16x32xf32>
    %42 = arith.mulf %37, %41 : vector<16x32xf32>
    %cst_21 = arith.constant 1.000000e+00 : f32
    %43 = vector.broadcast %cst_21 : f32 to vector<16x32xf32>
    %44 = arith.subf %43, %42 : vector<16x32xf32>
    %45 = arith.mulf %16, %44 : vector<16x32xf32>
    %cst_22 = arith.constant 1.000000e+00 : f32
    %46 = vector.broadcast %cst_22 : f32 to vector<16x32xf32>
    %47 = arith.addf %46, %45 : vector<16x32xf32>
    %48 = arith.mulf %9, %47 : vector<16x32xf32>
    %cst_23 = arith.constant dense<0.000000e+00> : vector<16xf32>
    %49 = vector.multi_reduction <add>, %48, %cst_23 [1] : vector<16x32xf32> to vector<16xf32>
    %50 = vector.shape_cast %49 : vector<16xf32> to vector<16x1xf32>
    %cst_24 = arith.constant 3.200000e+01 : f32
    %51 = vector.broadcast %cst_24 : f32 to vector<16x1xf32>
    %52 = arith.divf %50, %51 : vector<16x1xf32>
    %53 = vector.broadcast %52 : vector<16x1xf32> to vector<16x32xf32>
    %54 = arith.subf %48, %53 : vector<16x32xf32>
    %55 = vector.broadcast %52 : vector<16x1xf32> to vector<16x32xf32>
    %56 = arith.subf %48, %55 : vector<16x32xf32>
    %57 = arith.mulf %54, %56 : vector<16x32xf32>
    %cst_25 = arith.constant dense<0.000000e+00> : vector<16xf32>
    %58 = vector.multi_reduction <add>, %57, %cst_25 [1] : vector<16x32xf32> to vector<16xf32>
    %59 = vector.shape_cast %58 : vector<16xf32> to vector<16x1xf32>
    %cst_26 = arith.constant 3.200000e+01 : f32
    %60 = vector.broadcast %cst_26 : f32 to vector<16x1xf32>
    %61 = arith.divf %59, %60 : vector<16x1xf32>
    %62 = vector.broadcast %52 : vector<16x1xf32> to vector<16x32xf32>
    %63 = arith.subf %48, %62 : vector<16x32xf32>
    %cst_27 = arith.constant 9.99999996E-13 : f32
    %64 = vector.broadcast %cst_27 : f32 to vector<16x1xf32>
    %65 = arith.addf %61, %64 : vector<16x1xf32>
    %66 = math.rsqrt %65 : vector<16x1xf32>
    %67 = vector.broadcast %66 : vector<16x1xf32> to vector<16x32xf32>
    %68 = arith.mulf %63, %67 : vector<16x32xf32>
    %c0_28 = arith.constant 0 : index
    %c0_29 = arith.constant 0 : index
    %c0_30 = arith.constant 0 : index
    %69 = vector.load %arg4[%c0_28, %c0_29, %c0_30] : memref<1x1x32xf32, #tpu.memory_space<vmem>>, vector<1x1x32xf32>
    %70 = vector.shape_cast %69 : vector<1x1x32xf32> to vector<1x32xf32>
    %71 = vector.broadcast %70 : vector<1x32xf32> to vector<16x32xf32>
    %72 = arith.mulf %68, %71 : vector<16x32xf32>
    %c0_31 = arith.constant 0 : index
    %c0_32 = arith.constant 0 : index
    %c0_33 = arith.constant 0 : index
    %73 = vector.load %arg5[%c0_31, %c0_32, %c0_33] : memref<1x1x32xf32, #tpu.memory_space<vmem>>, vector<1x1x32xf32>
    %74 = vector.shape_cast %73 : vector<1x1x32xf32> to vector<1x32xf32>
    %75 = vector.broadcast %74 : vector<1x32xf32> to vector<16x32xf32>
    %76 = arith.addf %72, %75 : vector<16x32xf32>
    %c0_34 = arith.constant 0 : index
    %c0_35 = arith.constant 0 : index
    %c0_36 = arith.constant 0 : index
    %77 = vector.load %arg6[%c0_34, %c0_35, %c0_36] : memref<1x32x128xf32, #tpu.memory_space<vmem>>, vector<1x32x128xf32>
    %78 = vector.shape_cast %77 : vector<1x32x128xf32> to vector<32x128xf32>
    %cst_37 = arith.constant dense<0.000000e+00> : vector<16x128xf32>
    %79 = tpu.matmul %76, %78, %cst_37 {dimension_numbers = #tpu.dot_dimension_numbers<[1], [0], [0], [1], [0, 0, 1, 1], [], []>} : vector<16x32xf32>, vector<32x128xf32>, vector<16x128xf32> -> vector<16x128xf32>
    %c0_38 = arith.constant 0 : index
    %c0_39 = arith.constant 0 : index
    %c0_40 = arith.constant 0 : index
    %80 = vector.load %arg7[%c0_38, %c0_39, %c0_40] : memref<1x1x128xf32, #tpu.memory_space<vmem>>, vector<1x1x128xf32>
    %81 = vector.shape_cast %80 : vector<1x1x128xf32> to vector<1x128xf32>
    %82 = vector.broadcast %81 : vector<1x128xf32> to vector<16x128xf32>
    %83 = arith.addf %79, %82 : vector<16x128xf32>
    %c0_41 = arith.constant 0 : index
    %c0_42 = arith.constant 0 : index
    %c0_43 = arith.constant 0 : index
    %84 = vector.load %arg8[%c0_41, %c0_42, %c0_43] : memref<1x16x128xf32, #tpu.memory_space<vmem>>, vector<1x16x128xf32>
    %85 = vector.shape_cast %84 : vector<1x16x128xf32> to vector<16x128xf32>
    %86 = vector.shape_cast %83 : vector<16x128xf32> to vector<1x16x128xf32>
    tpu.vector_store %arg8[%c0_41, %c0_42, %c0_43], %86 {strides = array<i32>} : memref<1x16x128xf32, #tpu.memory_space<vmem>>, vector<1x16x128xf32>,
    return
  }
  func.func @transform_0(%arg0: i32) -> (i32, i32) {
    %c0_i32 = arith.constant 0 : i32
    %c0_i32_0 = arith.constant 0 : i32
    %c0_i32_1 = arith.constant 0 : i32
    return %c0_i32, %c0_i32_0 : i32, i32
  }
  func.func @transform_1(%arg0: i32) -> (i32, i32, i32) {
    %c0_i32 = arith.constant 0 : i32
    %c0_i32_0 = arith.constant 0 : i32
    %c0_i32_1 = arith.constant 0 : i32
    return %arg0, %c0_i32, %c0_i32_0 : i32, i32, i32
  }
  func.func @transform_2(%arg0: i32) -> (i32, i32, i32) {
    %c0_i32 = arith.constant 0 : i32
    %c0_i32_0 = arith.constant 0 : i32
    %c0_i32_1 = arith.constant 0 : i32
    return %arg0, %c0_i32, %c0_i32_0 : i32, i32, i32
  }
  func.func @transform_3(%arg0: i32) -> (i32, i32, i32) {
    %c0_i32 = arith.constant 0 : i32
    %c0_i32_0 = arith.constant 0 : i32
    %c0_i32_1 = arith.constant 0 : i32
    return %arg0, %c0_i32, %c0_i32_0 : i32, i32, i32
  }
  func.func @transform_4(%arg0: i32) -> (i32, i32, i32) {
    %c0_i32 = arith.constant 0 : i32
    %c0_i32_0 = arith.constant 0 : i32
    %c0_i32_1 = arith.constant 0 : i32
    return %arg0, %c0_i32, %c0_i32_0 : i32, i32, i32
  }
  func.func @transform_5(%arg0: i32) -> (i32, i32, i32) {
    %c0_i32 = arith.constant 0 : i32
    %c0_i32_0 = arith.constant 0 : i32
    %c0_i32_1 = arith.constant 0 : i32
    return %arg0, %c0_i32, %c0_i32_0 : i32, i32, i32
  }
  func.func @transform_6(%arg0: i32) -> (i32, i32, i32) {
    %c0_i32 = arith.constant 0 : i32
    %c0_i32_0 = arith.constant 0 : i32
    %c0_i32_1 = arith.constant 0 : i32
    return %arg0, %c0_i32, %c0_i32_0 : i32, i32, i32
  }
  func.func @transform_7(%arg0: i32) -> (i32, i32, i32) {
    %c0_i32 = arith.constant 0 : i32
    %c0_i32_0 = arith.constant 0 : i32
    %c0_i32_1 = arith.constant 0 : i32
    return %arg0, %c0_i32, %c0_i32_0 : i32, i32, i32
  }
}

</mosaic_0001>

<llo_original>
// kernel: squeeze.7
$region0: #{squeeze.7}
  %s0 = inlined_call_operand.vmem [shape: f32[1,16,30], index: 0, kind: input, shape index: {}]
  %s1 = inlined_call_operand.vmem [shape: f32[16,10,3], index: 1, kind: output, shape index: {}]
  $region1: #{squeeze.7} parent=0
    #allocation0 [shape = 'u8[40960]{0}', space=vmem, size = 0xa000, scoped, tag = 'scoped mem for output reshape']
    %v2 = vld [vmem:[%s0] sm:$0xff]
    %vm3 = vcmask 130048
    %4 = vst.msk [vmem:[#allocation0] sm:$0x7] %vm3, %v2
    %s5 = scalar_lea.vmem [#allocation0], 5
    %6 = vst.msk [vmem:[%s5] sm:$0x38] %vm3, %v2
    %s7 = scalar_lea.vmem [#allocation0], 10
    %8 = vst.msk [vmem:[%s7] sm:$0xc0] %vm3, %v2
    %s9 = scalar_lea.vmem %s0, 8
    %v10 = vld [vmem:[%s9] sm:$0xff]
    %vm11 = vcmask 130048
    %s12 = scalar_lea.vmem [#allocation0], 18
    %13 = vst.msk [vmem:[%s12] ss:$6 sm:$0x3] %vm11, %v10
    %s14 = scalar_lea.vmem [#allocation0], 23
    %15 = vst.msk [vmem:[%s14] sm:$0xc] %vm11, %v10
    %s16 = scalar_lea.vmem [#allocation0], 28
    %17 = vst.msk [vmem:[%s16] sm:$0x70] %vm11, %v10
    %s18 = scalar_lea.vmem [#allocation0], 33
    %19 = vst.msk [vmem:[%s18] sm:$0x80] %vm11, %v10
    %s20 = scalar_lea.vmem %s0, 16
    %v21 = vld [vmem:[%s20] sm:$0xff]
    %vm22 = vcmask 130048
    %s23 = scalar_lea.vmem [#allocation0], 41
    %24 = vst.msk [vmem:[%s23] sm:$0x3] %vm22, %v21
    %s25 = scalar_lea.vmem [#allocation0], 46
    %26 = vst.msk [vmem:[%s25] sm:$0x1c] %vm22, %v21
    %s27 = scalar_lea.vmem [#allocation0], 51
    %28 = vst.msk [vmem:[%s27] sm:$0xe0] %vm22, %v21
    %s29 = scalar_lea.vmem %s0, 24
    %v30 = vld [vmem:[%s29] sm:$0x3f]
    %vm31 = vcmask 130048
    %s32 = scalar_lea.vmem [#allocation0], 64
    %33 = vst.msk [vmem:[%s32] sm:$0x7] %vm31, %v30
    %s34 = scalar_lea.vmem [#allocation0], 69
    %35 = vst.msk [vmem:[%s34] sm:$0x38] %vm31, %v30
    %s37 = sshllo.u32 0, 4
    %v39 = vld [vmem:[#allocation0] sm:%s37]
    %s40 = sshllo.u32 0, 4
    %41 = vst [vmem:[%s1] sm:%s40] %v39
    %s42 = scalar_lea.vmem [#allocation0], 8
    %v43 = vld [vmem:[%s42] sm:%s37]
    %s44 = sshllo.u32 0, 4
    %s45 = scalar_lea.vmem %s1, 4
    %46 = vst [vmem:[%s45] sm:%s44] %v43
    %s47 = scalar_lea.vmem [#allocation0], 16
    %v48 = vld [vmem:[%s47] sm:%s37]
    %s49 = sshllo.u32 0, 4
    %s50 = smul.addr 4, 2
    %s51 = scalar_lea.vmem %s1, %s50
    %52 = vst [vmem:[%s51] sm:%s49] %v48
    %s53 = scalar_lea.vmem [#allocation0], 24
    %v54 = vld [vmem:[%s53] sm:%s37]
    %s55 = sshllo.u32 0, 4
    %s56 = smul.addr 4, 3
    %s57 = scalar_lea.vmem %s1, %s56
    %58 = vst [vmem:[%s57] sm:%s55] %v54
    %s59 = scalar_lea.vmem [#allocation0], 32
    %v60 = vld [vmem:[%s59] sm:%s37]
    %s61 = sshllo.u32 0, 4
    %s62 = smul.addr 4, 4
    %s63 = scalar_lea.vmem %s1, %s62
    %64 = vst [vmem:[%s63] sm:%s61] %v60
    %s65 = scalar_lea.vmem [#allocation0], 40
    %v66 = vld [vmem:[%s65] sm:%s37]
    %s67 = sshllo.u32 0, 4
    %s68 = smul.addr 4, 5
    %s69 = scalar_lea.vmem %s1, %s68
    %70 = vst [vmem:[%s69] sm:%s67] %v66
    %s71 = scalar_lea.vmem [#allocation0], 48
    %v72 = vld [vmem:[%s71] sm:%s37]
    %s73 = sshllo.u32 0, 4
    %s74 = smul.addr 4, 6
    %s75 = scalar_lea.vmem %s1, %s74
    %76 = vst [vmem:[%s75] sm:%s73] %v72
    %s77 = scalar_lea.vmem [#allocation0], 56
    %v78 = vld [vmem:[%s77] sm:%s37]
    %s79 = sshllo.u32 0, 4
    %s80 = smul.addr 4, 7
    %s81 = scalar_lea.vmem %s1, %s80
    %82 = vst [vmem:[%s81] sm:%s79] %v78
    %s83 = scalar_lea.vmem [#allocation0], 64
    %v84 = vld [vmem:[%s83] sm:%s37]
    %s85 = sshllo.u32 0, 4
    %s86 = smul.addr 4, 8
    %s87 = scalar_lea.vmem %s1, %s86
    %88 = vst [vmem:[%s87] sm:%s85] %v84
    %s89 = scalar_lea.vmem [#allocation0], 72
    %v90 = vld [vmem:[%s89] sm:%s37]
    %s91 = sshllo.u32 0, 4
    %s92 = smul.addr 4, 9
    %s93 = scalar_lea.vmem %s1, %s92
    %94 = vst [vmem:[%s93] sm:%s91] %v90

// kernel: squeeze.4
$region0: #{squeeze.4}
  %s0 = inlined_call_operand.vmem [shape: f32[1,16,14], index: 0, kind: input, shape index: {}]
  %s1 = inlined_call_operand.vmem [shape: f32[16,2,7], index: 1, kind: output, shape index: {}]
  %v2 = vld [vmem:[%s0] sm:$0xff]
  %vm3 = vcmask 130048
  %4 = vst.msk [vmem:[%s1] sm:$0x7f] %vm3, %v2
  %s5 = scalar_lea.vmem %s1, 1
  %6 = vst.msk [vmem:[%s5] sm:$0x80] %vm3, %v2
  %s7 = scalar_lea.vmem %s0, 8
  %v8 = vld [vmem:[%s7] sm:$0x3f]
  %vm9 = vcmask 130048
  %s10 = scalar_lea.vmem %s1, 9
  %11 = vst.msk [vmem:[%s10] sm:$0x3f] %vm9, %v8

// kernel: mt_head_forward.1
$region0: #{mt_head_forward.1}
  #allocation0 [shape = 'u32[]', space=smem, size = 0x4, offset = 0x4, fixed_abs, tag = 'smem constant byte address 0x4 - core index']
  #allocation1 [shape = 'u32[144,128]{1,0:T(1,128)}', space=vmem, size = 0x12000, scoped, tag = 'internal scratch']
  %s0 = inlined_call_operand.vmem [shape: f32[16,32], index: 0, kind: input, shape index: {}]
  %s1 = inlined_call_operand.hbm [shape: f32[2,32,32], index: 1, kind: input, shape index: {}]
  %s2 = inlined_call_operand.vmem [shape: f32[2,1,32], index: 2, kind: input, shape index: {}]
  %s3 = inlined_call_operand.vmem [shape: f32[2,1,32], index: 3, kind: input, shape index: {}]
  %s4 = inlined_call_operand.vmem [shape: f32[2,1,32], index: 4, kind: input, shape index: {}]
  %s5 = inlined_call_operand.hbm [shape: f32[2,32,128], index: 5, kind: input, shape index: {}]
  %s6 = inlined_call_operand.hbm [shape: f32[2,1,128], index: 6, kind: input, shape index: {}]
  %s7 = inlined_call_operand.vmem [shape: f32[2,16,128], index: 7, kind: output, shape index: {}]
  %s8 = sld [smem:[#allocation0]]
  $region73: #{mt_head_forward.1} parent=0
    _
  %s10 = ssub.s32 1, %s8
  %s11 = scalar_select 0, %s10, %s8
  $region1: #{mt_head_forward.1} parent=0
    #allocation2 [shape = 'u8[32768]{0}', space=vmem, size = 0x8000, scoped, tag = 'input window, operand 1']
    #allocation3 [shape = 's32[2]{0}', space=sflag, size = 0x8, scoped, tag = 'scoped memory for mt_head_forward.1']
    #allocation4 [shape = 'u8[32768]{0}', space=vmem, size = 0x8000, scoped, tag = 'input window, operand 5']
    #allocation5 [shape = 's32[2]{0}', space=sflag, size = 0x8, scoped, tag = 'scoped memory for mt_head_forward.1']
    #allocation6 [shape = 'u8[1024]{0}', space=vmem, size = 0x400, scoped, tag = 'input window, operand 6']
    %12 = vsyncpa [#allocation3], 0
    %s13 = scalar_lea.sflag [#allocation3], 1
    %14 = vsyncpa %s13, 0
    %15 = vsyncpa [#allocation5], 0
    %s16 = scalar_lea.sflag [#allocation5], 1
    %17 = vsyncpa %s16, 0
    loop: start=0, step=1, limit=4
    $region2: #{mt_head_forward.1} parent=1 // loop_pre_header
      _
    $region3: #{mt_head_forward.1} parent=1 // loop_header
      %s19 = sphi 0, %s23
      %p20 = scmp.ge.s32.totalorder %s19, 4
      %s27 = sphi 0, %s27
      %s29 = sphi 0, %s27
      %s30 = sphi 0, %s29
      %s44 = sphi 0, %s30
      %s50 = sphi 0, %s52
      %s53 = sphi 0, %s50
      %s54 = sphi 0, %s53
      %s70 = sphi 0, %s54
      %s76 = sphi 0, %s78
      %s79 = sphi 0, %s76
      %s80 = sphi 0, %s79
      %s96 = sphi 0, %s80
      %s102 = sphi 0, %s104
      %s105 = sphi 0, %s102
      %s106 = sphi 0, %s105
      %s122 = sphi 0, %s106
      %s128 = sphi 0, %s130
      %s131 = sphi 0, %s128
      %s132 = sphi 0, %s131
      %s148 = sphi 0, %s132
      %s154 = sphi 0, %s156
      %s157 = sphi 0, %s154
      %s158 = sphi 0, %s157
      %s174 = sphi 0, %s158
      %s180 = sphi 0, %s182
      %s183 = sphi 0, %s180
      %s184 = sphi 0, %s183
      %s200 = sphi 0, %s184
      %s206 = sphi 0, %s208
      %s209 = sphi 0, %s206
      %s210 = sphi 0, %s209
      %s226 = sphi 0, %s210
    $region4: #{mt_head_forward.1} parent=1 // loop_header_branch
      %22 = sbr.rel (%p20) target = $region8
    $region5: #{mt_head_forward.1} parent=1 // loop_body
      %s24 = ssub.s32 %s19, 1
      %s25 = ssub.s32 %s19, 2
      %s26 = sadd.s32 %s19, 1
      %s28 = sadd.s32 %s27, 1
      %p31 = scmp.eq.s32.totalorder %s19, 1
      %p32 = scmp.ne.s32.totalorder %s27, %s29
      %p33 = scmp.eq.s32.totalorder %s19, 0
      %p34 = por %p32, %p33
      %p35 = scmp.ne.s32.totalorder %s27, %s29
      %p36 = scmp.eq.s32.totalorder %s24, 1
      %p37 = por %p35, %p36
      %p38 = scmp.ne.s32.totalorder %s29, %s30
      %p39 = scmp.eq.s32.totalorder %s24, 0
      %p40 = por %p38, %p39
      %p41 = scmp.ne.s32.totalorder %s29, %s30
      %p42 = scmp.eq.s32.totalorder %s25, 1
      %p43 = por %p41, %p42
      %p45 = scmp.ne.s32.totalorder %s30, %s44
      %p46 = scmp.eq.s32.totalorder %s25, 0
      %p47 = por %p45, %p46
      %s48 = ssub.s32 %s19, %s26
      %p49 = scmp.eq.s32.totalorder %s48, 0
      %s51 = sadd.s32 %s50, 1
      %s52 = scalar_select %p49, %s50, %s51
      %p55 = pneg %p49
      %p56 = scmp.eq.s32.totalorder %s19, 1
      %p57 = por %p55, %p56
      %p58 = scmp.ne.s32.totalorder %s50, %s53
      %p59 = scmp.eq.s32.totalorder %s19, 0
      %p60 = por %p58, %p59
      %p61 = scmp.ne.s32.totalorder %s50, %s53
      %p62 = scmp.eq.s32.totalorder %s24, 1
      %p63 = por %p61, %p62
      %p64 = scmp.ne.s32.totalorder %s53, %s54
      %p65 = scmp.eq.s32.totalorder %s24, 0
      %p66 = por %p64, %p65
      %p67 = scmp.ne.s32.totalorder %s53, %s54
      %p68 = scmp.eq.s32.totalorder %s25, 1
      %p69 = por %p67, %p68
      %p71 = scmp.ne.s32.totalorder %s54, %s70
      %p72 = scmp.eq.s32.totalorder %s25, 0
      %p73 = por %p71, %p72
      %s74 = ssub.s32 %s19, %s26
      %p75 = scmp.eq.s32.totalorder %s74, 0
      %s77 = sadd.s32 %s76, 1
      %s78 = scalar_select %p75, %s76, %s77
      %p81 = pneg %p75
      %p82 = scmp.eq.s32.totalorder %s19, 1
      %p83 = por %p81, %p82
      %p84 = scmp.ne.s32.totalorder %s76, %s79
      %p85 = scmp.eq.s32.totalorder %s19, 0
      %p86 = por %p84, %p85
      %p87 = scmp.ne.s32.totalorder %s76, %s79
      %p88 = scmp.eq.s32.totalorder %s24, 1
      %p89 = por %p87, %p88
      %p90 = scmp.ne.s32.totalorder %s79, %s80
      %p91 = scmp.eq.s32.totalorder %s24, 0
      %p92 = por %p90, %p91
      %p93 = scmp.ne.s32.totalorder %s79, %s80
      %p94 = scmp.eq.s32.totalorder %s25, 1
      %p95 = por %p93, %p94
      %p97 = scmp.ne.s32.totalorder %s80, %s96
      %p98 = scmp.eq.s32.totalorder %s25, 0
      %p99 = por %p97, %p98
      %s100 = ssub.s32 %s19, %s26
      %p101 = scmp.eq.s32.totalorder %s100, 0
      %s103 = sadd.s32 %s102, 1
      %s104 = scalar_select %p101, %s102, %s103
      %p107 = pneg %p101
      %p108 = scmp.eq.s32.totalorder %s19, 1
      %p109 = por %p107, %p108
      %p110 = scmp.ne.s32.totalorder %s102, %s105
      %p111 = scmp.eq.s32.totalorder %s19, 0
      %p112 = por %p110, %p111
      %p113 = scmp.ne.s32.totalorder %s102, %s105
      %p114 = scmp.eq.s32.totalorder %s24, 1
      %p115 = por %p113, %p114
      %p116 = scmp.ne.s32.totalorder %s105, %s106
      %p117 = scmp.eq.s32.totalorder %s24, 0
      %p118 = por %p116, %p117
      %p119 = scmp.ne.s32.totalorder %s105, %s106
      %p120 = scmp.eq.s32.totalorder %s25, 1
      %p121 = por %p119, %p120
      %p123 = scmp.ne.s32.totalorder %s106, %s122
      %p124 = scmp.eq.s32.totalorder %s25, 0
      %p125 = por %p123, %p124
      %s126 = ssub.s32 %s19, %s26
      %p127 = scmp.eq.s32.totalorder %s126, 0
      %s129 = sadd.s32 %s128, 1
      %s130 = scalar_select %p127, %s128, %s129
      %p133 = pneg %p127
      %p134 = scmp.eq.s32.totalorder %s19, 1
      %p135 = por %p133, %p134
      %p136 = scmp.ne.s32.totalorder %s128, %s131
      %p137 = scmp.eq.s32.totalorder %s19, 0
      %p138 = por %p136, %p137
      %p139 = scmp.ne.s32.totalorder %s128, %s131
      %p140 = scmp.eq.s32.totalorder %s24, 1
      %p141 = por %p139, %p140
      %p142 = scmp.ne.s32.totalorder %s131, %s132
      %p143 = scmp.eq.s32.totalorder %s24, 0
      %p144 = por %p142, %p143
      %p145 = scmp.ne.s32.totalorder %s131, %s132
      %p146 = scmp.eq.s32.totalorder %s25, 1
      %p147 = por %p145, %p146
      %p149 = scmp.ne.s32.totalorder %s132, %s148
      %p150 = scmp.eq.s32.totalorder %s25, 0
      %p151 = por %p149, %p150
      %s152 = ssub.s32 %s19, %s26
      %p153 = scmp.eq.s32.totalorder %s152, 0
      %s155 = sadd.s32 %s154, 1
      %s156 = scalar_select %p153, %s154, %s155
      %p159 = pneg %p153
      %p160 = scmp.eq.s32.totalorder %s19, 1
      %p161 = por %p159, %p160
      %p162 = scmp.ne.s32.totalorder %s154, %s157
      %p163 = scmp.eq.s32.totalorder %s19, 0
      %p164 = por %p162, %p163
      %p165 = scmp.ne.s32.totalorder %s154, %s157
      %p166 = scmp.eq.s32.totalorder %s24, 1
      %p167 = por %p165, %p166
      %p168 = scmp.ne.s32.totalorder %s157, %s158
      %p169 = scmp.eq.s32.totalorder %s24, 0
      %p170 = por %p168, %p169
      %p171 = scmp.ne.s32.totalorder %s157, %s158
      %p172 = scmp.eq.s32.totalorder %s25, 1
      %p173 = por %p171, %p172
      %p175 = scmp.ne.s32.totalorder %s158, %s174
      %p176 = scmp.eq.s32.totalorder %s25, 0
      %p177 = por %p175, %p176
      %s178 = ssub.s32 %s19, %s26
      %p179 = scmp.eq.s32.totalorder %s178, 0
      %s181 = sadd.s32 %s180, 1
      %s182 = scalar_select %p179, %s180, %s181
      %p185 = pneg %p179
      %p186 = scmp.eq.s32.totalorder %s19, 1
      %p187 = por %p185, %p186
      %p188 = scmp.ne.s32.totalorder %s180, %s183
      %p189 = scmp.eq.s32.totalorder %s19, 0
      %p190 = por %p188, %p189
      %p191 = scmp.ne.s32.totalorder %s180, %s183
      %p192 = scmp.eq.s32.totalorder %s24, 1
      %p193 = por %p191, %p192
      %p194 = scmp.ne.s32.totalorder %s183, %s184
      %p195 = scmp.eq.s32.totalorder %s24, 0
      %p196 = por %p194, %p195
      %p197 = scmp.ne.s32.totalorder %s183, %s184
      %p198 = scmp.eq.s32.totalorder %s25, 1
      %p199 = por %p197, %p198
      %p201 = scmp.ne.s32.totalorder %s184, %s200
      %p202 = scmp.eq.s32.totalorder %s25, 0
      %p203 = por %p201, %p202
      %s204 = ssub.s32 %s19, %s26
      %p205 = scmp.eq.s32.totalorder %s204, 0
      %s207 = sadd.s32 %s206, 1
      %s208 = scalar_select %p205, %s206, %s207
      %p211 = pneg %p205
      %p212 = scmp.eq.s32.totalorder %s19, 1
      %p213 = por %p211, %p212
      %p214 = scmp.ne.s32.totalorder %s206, %s209
      %p215 = scmp.eq.s32.totalorder %s19, 0
      %p216 = por %p214, %p215
      %p217 = scmp.ne.s32.totalorder %s206, %s209
      %p218 = scmp.eq.s32.totalorder %s24, 1
      %p219 = por %p217, %p218
      %p220 = scmp.ne.s32.totalorder %s209, %s210
      %p221 = scmp.eq.s32.totalorder %s24, 0
      %p222 = por %p220, %p221
      %p223 = scmp.ne.s32.totalorder %s209, %s210
      %p224 = scmp.eq.s32.totalorder %s25, 1
      %p225 = por %p223, %p224
      %p227 = scmp.ne.s32.totalorder %s210, %s226
      %p228 = scmp.eq.s32.totalorder %s25, 0
      %p229 = por %p227, %p228
      %p230 = scmp.le.s32.totalorder 1, %s19
      %p231 = scmp.lt.s32.totalorder %s19, 3
      %p232 = pnand %p230, %p231
      %p233 = pneg %p232
      // Predicated region
      $region9: #{mt_head_forward.1} parent=5 // pred_check
        _
      $region10: #{mt_head_forward.1} parent=5 // pred_check_branch
        %235 = sbr.rel (%p232) target = $region12
      $region11: #{mt_head_forward.1} parent=5 // pred_region
        %s236 = ssub.s32 %s19, 1
        // Predicated region
        $region13: #{mt_head_forward.1} parent=11 // pred_check
          %p237 = pneg %p40
        $region14: #{mt_head_forward.1} parent=11 // pred_check_branch
          %239 = sbr.rel (%p237) target = $region16
        $region15: #{mt_head_forward.1} parent=11 // pred_region
          _
        $region16: #{mt_head_forward.1} parent=11 // pred_fallthru
          _
      $region12: #{mt_head_forward.1} parent=5 // pred_fallthru
        _
      %p240 = scmp.lt.s32.totalorder %s19, 2
      // Predicated region
      $region17: #{mt_head_forward.1} parent=5 // pred_check
        %p241 = pneg %p240
      $region18: #{mt_head_forward.1} parent=5 // pred_check_branch
        %243 = sbr.rel (%p241) target = $region20
      $region19: #{mt_head_forward.1} parent=5 // pred_region
        // Predicated region
        $region21: #{mt_head_forward.1} parent=19 // pred_check
          %p244 = pneg %p60
        $region22: #{mt_head_forward.1} parent=19 // pred_check_branch
          %246 = sbr.rel (%p244) target = $region24
        $region23: #{mt_head_forward.1} parent=19 // pred_region
          %s247 = sand.u32 %s50, 1
          %s248 = scalar_lea.sflag [#allocation3], %s247
          %s249 = sand.u32 %s50, 1
          %s250 = smul.addr %s249, 32
          %s251 = scalar_lea.vmem [#allocation2], %s250
          %s253 = ssub.s32 512, 512
          %254 = vsyncadd %s248, %s253
          %s255 = smul.addr %s19, 4
          %s256 = smul.addr %s255, 128
          %s257 = scalar_lea.hbm %s1, %s256
          %s258 = sshll.u32 %s251, 4
          %s259 = int_to_ptr.vmem [resolvable:$true] %s258
          %264 = dma.hbm_to_vmem [thread:$0]  %s257, 512, %s259, %s248, 128, 128, 8
        $region24: #{mt_head_forward.1} parent=19 // pred_fallthru
          _
        // Predicated region
        $region25: #{mt_head_forward.1} parent=19 // pred_check
          %p265 = pneg %p86
        $region26: #{mt_head_forward.1} parent=19 // pred_check_branch
          %267 = sbr.rel (%p265) target = $region28
        $region27: #{mt_head_forward.1} parent=19 // pred_region
          %p268 = scmp.lt.s32.totalorder %s19, 1
          %s269 = scalar_select %p268, %s19, 1
          %s270 = scalar_lea.vmem %s2, %s269
        $region28: #{mt_head_forward.1} parent=19 // pred_fallthru
          _
        // Predicated region
        $region29: #{mt_head_forward.1} parent=19 // pred_check
          %p271 = pneg %p112
        $region30: #{mt_head_forward.1} parent=19 // pred_check_branch
          %273 = sbr.rel (%p271) target = $region32
        $region31: #{mt_head_forward.1} parent=19 // pred_region
          %p274 = scmp.lt.s32.totalorder %s19, 1
          %s275 = scalar_select %p274, %s19, 1
          %s276 = scalar_lea.vmem %s3, %s275
        $region32: #{mt_head_forward.1} parent=19 // pred_fallthru
          _
        // Predicated region
        $region33: #{mt_head_forward.1} parent=19 // pred_check
          %p277 = pneg %p138
        $region34: #{mt_head_forward.1} parent=19 // pred_check_branch
          %279 = sbr.rel (%p277) target = $region36
        $region35: #{mt_head_forward.1} parent=19 // pred_region
          %p280 = scmp.lt.s32.totalorder %s19, 1
          %s281 = scalar_select %p280, %s19, 1
          %s282 = scalar_lea.vmem %s4, %s281
        $region36: #{mt_head_forward.1} parent=19 // pred_fallthru
          _
        // Predicated region
        $region37: #{mt_head_forward.1} parent=19 // pred_check
          %p283 = pneg %p164
        $region38: #{mt_head_forward.1} parent=19 // pred_check_branch
          %285 = sbr.rel (%p283) target = $region40
        $region39: #{mt_head_forward.1} parent=19 // pred_region
          %s286 = sand.u32 %s19, 1
          %s287 = scalar_lea.sflag [#allocation5], %s286
          %s288 = sand.u32 %s154, 1
          %s289 = smul.addr %s288, 32
          %s290 = scalar_lea.vmem [#allocation4], %s289
          %s292 = ssub.s32 512, 512
          %293 = vsyncadd %s287, %s292
          %s294 = smul.addr %s19, 4
          %s295 = smul.addr %s294, 128
          %s296 = scalar_lea.hbm %s5, %s295
          %s297 = sshll.u32 %s290, 4
          %s298 = int_to_ptr.vmem [resolvable:$true] %s297
          %303 = dma.hbm_to_vmem [thread:$0]  %s296, 512, %s298, %s287, 128, 128, 8
        $region40: #{mt_head_forward.1} parent=19 // pred_fallthru
          _
        // Predicated region
        $region41: #{mt_head_forward.1} parent=19 // pred_check
          %p304 = pneg %p190
        $region42: #{mt_head_forward.1} parent=19 // pred_check_branch
          %306 = sbr.rel (%p304) target = $region44
        $region43: #{mt_head_forward.1} parent=19 // pred_region
          %s307 = sand.u32 %s19, 1
          %s308 = scalar_lea.sflag [#allocation5], %s307
          %s309 = sand.u32 %s180, 1
          %s310 = scalar_lea.vmem [#allocation6], %s309
          %s312 = ssub.s32 16, 16
          %313 = vsyncadd %s308, %s312
          %s314 = smul.addr %s19, 16
          %s315 = scalar_lea.hbm %s6, %s314
          %s317 = sshll.u32 %s310, 4
          %s318 = int_to_ptr.vmem [resolvable:$true] %s317
          %320 = dma.hbm_to_vmem [thread:$0]  %s315, 16, %s318, %s308
        $region44: #{mt_head_forward.1} parent=19 // pred_fallthru
          _
      $region20: #{mt_head_forward.1} parent=5 // pred_fallthru
        _
      %p321 = scmp.le.s32.totalorder 1, %s19
      %p322 = scmp.lt.s32.totalorder %s19, 3
      %p323 = pnand %p321, %p322
      %p324 = pneg %p323
      // Predicated region
      $region45: #{mt_head_forward.1} parent=5 // pred_check
        _
      $region46: #{mt_head_forward.1} parent=5 // pred_check_branch
        %326 = sbr.rel (%p323) target = $region48
      $region47: #{mt_head_forward.1} parent=5 // pred_region
        %s327 = ssub.s32 %s19, 1
        %s328 = sand.u32 %s53, 1
        %s329 = scalar_lea.sflag [#allocation3], %s328
        %s330 = sand.u32 %s53, 1
        %s331 = smul.addr %s330, 32
        %s332 = scalar_lea.vmem [#allocation2], %s331
        // Predicated region
        $region49: #{mt_head_forward.1} parent=47 // pred_check
          %p333 = pneg %p66
        $region50: #{mt_head_forward.1} parent=47 // pred_check_branch
          %335 = sbr.rel (%p333) target = $region52
        $region51: #{mt_head_forward.1} parent=47 // pred_region
          %336 = dma.done %s329, 512
        $region52: #{mt_head_forward.1} parent=47 // pred_fallthru
          _
        %s337 = sand.u32 %s24, 1
        %s338 = scalar_lea.sflag [#allocation5], %s337
        %s339 = sand.u32 %s157, 1
        %s340 = smul.addr %s339, 32
        %s341 = scalar_lea.vmem [#allocation4], %s340
        // Predicated region
        $region53: #{mt_head_forward.1} parent=47 // pred_check
          %p342 = pneg %p170
        $region54: #{mt_head_forward.1} parent=47 // pred_check_branch
          %344 = sbr.rel (%p342) target = $region56
        $region55: #{mt_head_forward.1} parent=47 // pred_region
          %345 = dma.done %s338, 512
        $region56: #{mt_head_forward.1} parent=47 // pred_fallthru
          _
        %s346 = sand.u32 %s24, 1
        %s347 = scalar_lea.sflag [#allocation5], %s346
        %s348 = sand.u32 %s183, 1
        %s349 = scalar_lea.vmem [#allocation6], %s348
        // Predicated region
        $region57: #{mt_head_forward.1} parent=47 // pred_check
          %p350 = pneg %p196
        $region58: #{mt_head_forward.1} parent=47 // pred_check_branch
          %352 = sbr.rel (%p350) target = $region60
        $region59: #{mt_head_forward.1} parent=47 // pred_region
          %353 = dma.done %s347, 16
        $region60: #{mt_head_forward.1} parent=47 // pred_fallthru
          _
        %p354 = pneg %p40
        %p355 = pneg %p37
        %s356 = sand.u32 %s53, 1
        %s357 = scalar_lea.sflag [#allocation3], %s356
        %s358 = sand.u32 %s53, 1
        %s359 = smul.addr %s358, 32
        %s360 = scalar_lea.vmem [#allocation2], %s359
        %p361 = pneg %p66
        %p362 = pneg %p63
        %p363 = scmp.lt.s32.totalorder %s24, 1
        %s364 = scalar_select %p363, %s24, 1
        %s365 = scalar_lea.vmem %s2, %s364
        %p366 = pneg %p92
        %p367 = pneg %p89
        %p368 = scmp.lt.s32.totalorder %s24, 1
        %s369 = scalar_select %p368, %s24, 1
        %s370 = scalar_lea.vmem %s3, %s369
        %p371 = pneg %p118
        %p372 = pneg %p115
        %p373 = scmp.lt.s32.totalorder %s24, 1
        %s374 = scalar_select %p373, %s24, 1
        %s375 = scalar_lea.vmem %s4, %s374
        %p376 = pneg %p144
        %p377 = pneg %p141
        %s378 = sand.u32 %s24, 1
        %s379 = scalar_lea.sflag [#allocation5], %s378
        %s380 = sand.u32 %s157, 1
        %s381 = smul.addr %s380, 32
        %s382 = scalar_lea.vmem [#allocation4], %s381
        %p383 = pneg %p170
        %p384 = pneg %p167
        %s385 = sand.u32 %s24, 1
        %s386 = scalar_lea.sflag [#allocation5], %s385
        %s387 = sand.u32 %s183, 1
        %s388 = scalar_lea.vmem [#allocation6], %s387
        %p389 = pneg %p196
        %p390 = pneg %p193
        %p391 = pneg %p222
        %p392 = pneg %p219
        %p393 = scmp.lt.s32.totalorder %s24, 1
        %s394 = scalar_select %p393, %s24, 1
        %s395 = smul.addr %s394, 2
        %s396 = smul.addr %s395, 8
        %s397 = scalar_lea.vmem %s7, %s396
        %p398 = scmp.lt.s32.totalorder %s24, 1
        %s399 = scalar_select %p398, %s24, 1
        %s400 = scalar_lea.vmem %s2, %s399
        %p401 = scmp.lt.s32.totalorder %s24, 1
        %s402 = scalar_select %p401, %s24, 1
        %s403 = scalar_lea.vmem %s3, %s402
        %p404 = scmp.lt.s32.totalorder %s24, 1
        %s405 = scalar_select %p404, %s24, 1
        %s406 = scalar_lea.vmem %s4, %s405
        %p407 = scmp.lt.s32.totalorder %s24, 1
        %s408 = scalar_select %p407, %s24, 1
        %s409 = smul.addr %s408, 2
        %s410 = smul.addr %s409, 8
        %s411 = scalar_lea.vmem %s7, %s410
        %v412 = vld [vmem:[%s0] sm:$0xff]
        %v413 = vld [vmem:[%s0 + $0x8] sm:$0xff]
        %v414 = vld [vmem:[%s332] sm:$0xff]
        %v415 = vld [vmem:[%s332 + $0x8] sm:$0xff]
        %v416 = vld [vmem:[%s332 + $0x10] sm:$0xff]
        %v417 = vld [vmem:[%s332 + $0x18] sm:$0xff]
        %v418 = vld [vmem:[%s400] sm:$0x1]
        %v420 = vlaneseq
        %v421 = vshrl.u32 %v420, 7
        %v422 = vsub.s32 0, %v421
        %v423 = vrot.slane %v418, %v422
        %vm425 = vcmask 261120
        %v427 = vsel %vm425, %v412, 0
        %v430 = vsel %vm425, %v413, 0
        %432 = vmatprep.subr.mxu0 0.0
        %433 = vmatpush1.msra.mxu0 %v414
        %434 = vmatprep.subr.mxu0 0.0
        %435 = vmatpush1.msra.mxu0 %v415
        %436 = vmatprep.subr.mxu0 0.0
        %437 = vmatpush1.msra.mxu0 %v416
        %438 = vmatprep.subr.mxu0 0.0
        %439 = vmatpush1.msra.mxu0 %v417
        %440 = vmatprep.subr.mxu0 0.0
        %441 = vmatpush1.msra.mxu0 0.0
        %442 = vmatprep.subr.mxu0 0.0
        %443 = vmatpush1.msra.mxu0 0.0
        %444 = vmatprep.subr.mxu0 0.0
        %445 = vmatpush1.msra.mxu0 0.0
        %446 = vmatprep.subr.mxu0 0.0
        %447 = vmatpush1.msra.mxu0 0.0
        %448 = vmatprep.subr.mxu0 0.0
        %449 = vmatpush1.msra.mxu0 0.0
        %450 = vmatprep.subr.mxu0 0.0
        %451 = vmatpush1.msra.mxu0 0.0
        %452 = vmatprep.subr.mxu0 0.0
        %453 = vmatpush1.msra.mxu0 0.0
        %454 = vmatprep.subr.mxu0 0.0
        %455 = vmatpush1.msra.mxu0 0.0
        %456 = vmatprep.subr.mxu0 0.0
        %457 = vmatpush1.msra.mxu0 0.0
        %458 = vmatprep.subr.mxu0 0.0
        %459 = vmatpush1.msra.mxu0 0.0
        %460 = vmatprep.subr.mxu0 0.0
        %461 = vmatpush1.msra.mxu0 0.0
        %462 = vmatprep.subr.mxu0 0.0
        %463 = vmatpush1.msra.mxu0 0.0
        %464 = vmatprep.subr.mxu0 0.0
        %465 = vmatpush1.msra.mxu0 0.0
        %466 = vmatprep.subr.mxu0 0.0
        %467 = vmatpush1.msra.mxu0 0.0
        %468 = vmatprep.subr.mxu0 0.0
        %469 = vmatpush1.msra.mxu0 0.0
        %470 = vmatprep.subr.mxu0 0.0
        %471 = vmatpush1.msra.mxu0 0.0
        %472 = vmatprep.subr.mxu0 0.0
        %473 = vmatpush1.msra.mxu0 0.0
        %474 = vmatprep.subr.mxu0 0.0
        %475 = vmatpush1.msra.mxu0 0.0
        %476 = vmatprep.subr.mxu0 0.0
        %477 = vmatpush1.msra.mxu0 0.0
        %478 = vmatprep.subr.mxu0 0.0
        %479 = vmatpush1.msra.mxu0 0.0
        %480 = vmatprep.subr.mxu0 0.0
        %481 = vmatpush1.msra.mxu0 0.0
        %482 = vmatprep.subr.mxu0 0.0
        %483 = vmatpush1.msra.mxu0 0.0
        %484 = vmatprep.subr.mxu0 0.0
        %485 = vmatpush1.msra.mxu0 0.0
        %486 = vmatprep.subr.mxu0 0.0
        %487 = vmatpush1.msra.mxu0 0.0
        %488 = vmatprep.subr.mxu0 0.0
        %489 = vmatpush1.msra.mxu0 0.0
        %490 = vmatprep.subr.mxu0 0.0
        %491 = vmatpush1.msra.mxu0 0.0
        %492 = vmatprep.subr.mxu0 0.0
        %493 = vmatpush1.msra.mxu0 0.0
        %494 = vmatprep.subr.mxu0 0.0
        %495 = vmatpush1.msra.mxu0 0.0
        %496 = vmatprep.mubr.f32.mxu0 0.0
        %497 = vmatmul.mubr.f32.gmra.mrb[0].mxu0 %v427
        %v498 = vpop.f32.mrb[0].mxu0
        %v499 = vadd.f32 %v423, %v498
        %v500 = vpop.f32.mrb[0].mxu0
        %501 = vmatprep.mubr.f32.mxu0 0.0
        %502 = vmatmul.mubr.f32.gmra.mrb[0].mxu0 %v430
        %v503 = vpop.f32.mrb[0].mxu0
        %v504 = vadd.f32 %v423, %v503
        %v505 = vpop.f32.mrb[0].mxu0
        %506 = vdwg.mxu0
        %v507 = vmul.f32 %v499, 0.5
        %v508 = vmul.f32 %v504, 0.5
        %v509 = vmul.f32 %v499, 0.70710677
        %v510 = vmul.f32 %v504, 0.70710677
        %vm511 = vcmp.ge.f32.partialorder %v509, 0.0
        %vm512 = vcmp.ge.f32.partialorder %v510, 0.0
        %v513 = vsel %vm511, 1.0, -1.0
        %v514 = vsel %vm512, 1.0, -1.0
        %v515 = vand.u32 2147483647, %v509
        %v516 = vand.u32 2147483647, %v510
        %v517 = vmul.f32 %v515, 0.3275911
        %v518 = vmul.f32 %v516, 0.3275911
        %v519 = vadd.f32 %v517, 1.0
        %v520 = vadd.f32 %v518, 1.0
        %v521 = vrcp.pop %v519
        %v522 = vmul.f32 1.0, %v521
        %v523 = vrcp.pop %v520
        %v524 = vmul.f32 1.0, %v523
        %v525 = vmul.f32 %v522, 1.0614054
        %v526 = vmul.f32 %v524, 1.0614054
        %v527 = vadd.f32 %v525, -1.4531521
        %v528 = vadd.f32 %v526, -1.4531521
        %v529 = vmul.f32 %v527, %v522
        %v530 = vmul.f32 %v528, %v524
        %v531 = vadd.f32 %v529, 1.4214138
        %v532 = vadd.f32 %v530, 1.4214138
        %v533 = vmul.f32 %v531, %v522
        %v534 = vmul.f32 %v532, %v524
        %v535 = vadd.f32 %v533, -0.28449672
        %v536 = vadd.f32 %v534, -0.28449672
        %v537 = vmul.f32 %v535, %v522
        %v538 = vmul.f32 %v536, %v524
        %v539 = vadd.f32 %v537, 0.2548296
        %v540 = vadd.f32 %v538, 0.2548296
        %v541 = vmul.f32 %v539, %v522
        %v542 = vmul.f32 %v540, %v524
        %v543 = vsub.f32 0.0, %v515
        %v544 = vsub.f32 0.0, %v516
        %v545 = vmul.f32 %v543, %v515
        %v546 = vmul.f32 %v544, %v516
        %v547 = vmul.f32 %v545, 1.442695
        %v548 = vpow.pop %v547
        %v549 = vmul.f32 %v546, 1.442695
        %v550 = vpow.pop %v549
        %v551 = vmul.f32 %v541, %v548
        %v552 = vmul.f32 %v542, %v550
        %v553 = vsub.f32 1.0, %v551
        %v554 = vsub.f32 1.0, %v552
        %v555 = vmul.f32 %v513, %v553
        %v556 = vmul.f32 %v514, %v554
        %v557 = vadd.f32 %v555, 1.0
        %v558 = vadd.f32 %v556, 1.0
        %v559 = vmul.f32 %v507, %v557
        %v560 = vmul.f32 %v508, %v558
        %v561 = vsel %vm425, %v559, 0.0
        %562 = vadd.xlane.f32.xlu0 %v561
        %v563 = vpop.xlane.xlu0 %562
        %v564 = vsel %vm425, %v560, 0.0
        %565 = vadd.xlane.f32.xlu0 %v564
        %v566 = vpop.xlane.xlu0 %565
        %v567 = vrcp.pop 32.0
        %v568 = vmul.f32 %v563, %v567
        %v569 = vmul.f32 %v566, %v567
        %v570 = vsub.f32 %v559, %v568
        %v571 = vsub.f32 %v560, %v569
        %v572 = vmul.f32 %v570, %v570
        %v573 = vmul.f32 %v571, %v571
        %v574 = vsel %vm425, %v572, 0.0
        %575 = vadd.xlane.f32.xlu0 %v574
        %v576 = vpop.xlane.xlu0 %575
        %v577 = vsel %vm425, %v573, 0.0
        %578 = vadd.xlane.f32.xlu0 %v577
        %v579 = vpop.xlane.xlu0 %578
        %v580 = vmul.f32 %v576, %v567
        %v581 = vmul.f32 %v579, %v567
        %v582 = vadd.f32 %v580, 1e-12
        %v583 = vadd.f32 %v581, 1e-12
        %v584 = vrsqrt.pop %v582
        %v585 = vrsqrt.pop %v583
        %v586 = vmul.f32 %v570, %v584
        %v587 = vmul.f32 %v571, %v585
        %v588 = vld [vmem:[%s403] sm:$0x1]
        %v590 = vlaneseq
        %v591 = vshrl.u32 %v590, 7
        %v592 = vsub.s32 0, %v591
        %v593 = vrot.slane %v588, %v592
        %v595 = vmul.f32 %v586, %v593
        %v596 = vmul.f32 %v587, %v593
        %v597 = vld [vmem:[%s406] sm:$0x1]
        %v599 = vlaneseq
        %v600 = vshrl.u32 %v599, 7
        %v601 = vsub.s32 0, %v600
        %v602 = vrot.slane %v597, %v601
        %v604 = vadd.f32 %v595, %v602
        %v605 = vadd.f32 %v596, %v602
        %v606 = vld [vmem:[%s341] sm:$0xff]
        %v607 = vld [vmem:[%s341 + $0x8] sm:$0xff]
        %v608 = vld [vmem:[%s341 + $0x10] sm:$0xff]
        %v609 = vld [vmem:[%s341 + $0x18] sm:$0xff]
        %v610 = vld [vmem:[%s349] sm:$0x1]
        %v612 = vlaneseq
        %v613 = vshrl.u32 %v612, 7
        %v614 = vsub.s32 0, %v613
        %v615 = vrot.slane %v610, %v614
        %v618 = vsel %vm425, %v604, 0
        %v621 = vsel %vm425, %v605, 0
        %623 = vmatprep.subr.mxu0 0.0
        %624 = vmatpush1.msra.mxu0 %v606
        %625 = vmatprep.subr.mxu0 0.0
        %626 = vmatpush1.msra.mxu0 %v607
        %627 = vmatprep.subr.mxu0 0.0
        %628 = vmatpush1.msra.mxu0 %v608
        %629 = vmatprep.subr.mxu0 0.0
        %630 = vmatpush1.msra.mxu0 %v609
        %631 = vmatprep.subr.mxu0 0.0
        %632 = vmatpush1.msra.mxu0 0.0
        %633 = vmatprep.subr.mxu0 0.0
        %634 = vmatpush1.msra.mxu0 0.0
        %635 = vmatprep.subr.mxu0 0.0
        %636 = vmatpush1.msra.mxu0 0.0
        %637 = vmatprep.subr.mxu0 0.0
        %638 = vmatpush1.msra.mxu0 0.0
        %639 = vmatprep.subr.mxu0 0.0
        %640 = vmatpush1.msra.mxu0 0.0
        %641 = vmatprep.subr.mxu0 0.0
        %642 = vmatpush1.msra.mxu0 0.0
        %643 = vmatprep.subr.mxu0 0.0
        %644 = vmatpush1.msra.mxu0 0.0
        %645 = vmatprep.subr.mxu0 0.0
        %646 = vmatpush1.msra.mxu0 0.0
        %647 = vmatprep.subr.mxu0 0.0
        %648 = vmatpush1.msra.mxu0 0.0
        %649 = vmatprep.subr.mxu0 0.0
        %650 = vmatpush1.msra.mxu0 0.0
        %651 = vmatprep.subr.mxu0 0.0
        %652 = vmatpush1.msra.mxu0 0.0
        %653 = vmatprep.subr.mxu0 0.0
        %654 = vmatpush1.msra.mxu0 0.0
        %655 = vmatprep.subr.mxu0 0.0
        %656 = vmatpush1.msra.mxu0 0.0
        %657 = vmatprep.subr.mxu0 0.0
        %658 = vmatpush1.msra.mxu0 0.0
        %659 = vmatprep.subr.mxu0 0.0
        %660 = vmatpush1.msra.mxu0 0.0
        %661 = vmatprep.subr.mxu0 0.0
        %662 = vmatpush1.msra.mxu0 0.0
        %663 = vmatprep.subr.mxu0 0.0
        %664 = vmatpush1.msra.mxu0 0.0
        %665 = vmatprep.subr.mxu0 0.0
        %666 = vmatpush1.msra.mxu0 0.0
        %667 = vmatprep.subr.mxu0 0.0
        %668 = vmatpush1.msra.mxu0 0.0
        %669 = vmatprep.subr.mxu0 0.0
        %670 = vmatpush1.msra.mxu0 0.0
        %671 = vmatprep.subr.mxu0 0.0
        %672 = vmatpush1.msra.mxu0 0.0
        %673 = vmatprep.subr.mxu0 0.0
        %674 = vmatpush1.msra.mxu0 0.0
        %675 = vmatprep.subr.mxu0 0.0
        %676 = vmatpush1.msra.mxu0 0.0
        %677 = vmatprep.subr.mxu0 0.0
        %678 = vmatpush1.msra.mxu0 0.0
        %679 = vmatprep.subr.mxu0 0.0
        %680 = vmatpush1.msra.mxu0 0.0
        %681 = vmatprep.subr.mxu0 0.0
        %682 = vmatpush1.msra.mxu0 0.0
        %683 = vmatprep.subr.mxu0 0.0
        %684 = vmatpush1.msra.mxu0 0.0
        %685 = vmatprep.subr.mxu0 0.0
        %686 = vmatpush1.msra.mxu0 0.0
        %687 = vmatprep.mubr.f32.mxu0 0.0
        %688 = vmatmul.mubr.f32.gmra.mrb[0].mxu0 %v618
        %v689 = vpop.f32.mrb[0].mxu0
        %v690 = vadd.f32 %v615, %v689
        %v691 = vpop.f32.mrb[0].mxu0
        %692 = vmatprep.mubr.f32.mxu0 0.0
        %693 = vmatmul.mubr.f32.gmra.mrb[0].mxu0 %v621
        %v694 = vpop.f32.mrb[0].mxu0
        %v695 = vadd.f32 %v615, %v694
        %v696 = vpop.f32.mrb[0].mxu0
        %697 = vdwg.mxu0
        %698 = vst [vmem:[%s411] sm:$0xff] %v690
        %699 = vst [vmem:[%s411 + $0x8] sm:$0xff] %v695
        %p700 = scmp.lt.s32.totalorder %s24, 1
        %s701 = scalar_select %p700, %s24, 1
        %s702 = smul.addr %s701, 2
        %s703 = smul.addr %s702, 8
        %s704 = scalar_lea.vmem %s7, %s703
        // Predicated region
        $region61: #{mt_head_forward.1} parent=47 // pred_check
          %p705 = pneg %p219
        $region62: #{mt_head_forward.1} parent=47 // pred_check_branch
          %707 = sbr.rel (%p705) target = $region64
        $region63: #{mt_head_forward.1} parent=47 // pred_region
          _
        $region64: #{mt_head_forward.1} parent=47 // pred_fallthru
          _
      $region48: #{mt_head_forward.1} parent=5 // pred_fallthru
        _
      %p708 = scmp.le.s32.totalorder 2, %s19
      // Predicated region
      $region65: #{mt_head_forward.1} parent=5 // pred_check
        %p709 = pneg %p708
      $region66: #{mt_head_forward.1} parent=5 // pred_check_branch
        %711 = sbr.rel (%p709) target = $region68
      $region67: #{mt_head_forward.1} parent=5 // pred_region
        %s712 = ssub.s32 %s19, 2
        // Predicated region
        $region69: #{mt_head_forward.1} parent=67 // pred_check
          %p713 = pneg %p225
        $region70: #{mt_head_forward.1} parent=67 // pred_check_branch
          %715 = sbr.rel (%p713) target = $region72
        $region71: #{mt_head_forward.1} parent=67 // pred_region
          %p716 = scmp.lt.s32.totalorder %s25, 1
          %s717 = scalar_select %p716, %s25, 1
          %s718 = smul.addr %s717, 2
          %s719 = smul.addr %s718, 8
          %s720 = scalar_lea.vmem %s7, %s719
        $region72: #{mt_head_forward.1} parent=67 // pred_fallthru
          _
      $region68: #{mt_head_forward.1} parent=5 // pred_fallthru
        _
    $region6: #{mt_head_forward.1} parent=1 // loop_footer
      %s23 = sadd.s32 1, %s19
    $region7: #{mt_head_forward.1} parent=1 // loop_footer_branch
      %18 = sbr.rel target = $region3
    $region8: #{mt_head_forward.1} parent=1 // loop_exit
      _
    %721 = vsyncpa [#allocation3], 1
    %s722 = scalar_lea.sflag [#allocation3], 1
    %723 = vsyncpa %s722, 1
    %724 = vsyncpa [#allocation5], 1
    %s725 = scalar_lea.sflag [#allocation5], 1
    %726 = vsyncpa %s725, 1

</llo_original>
